<compile_context>
chip_gen: v7x
topology: tpu7x:2x2x1
jax: 0.10.0
libtpu: 0.0.40
codegen_flags: <defaults>
</compile_context>

<pallas_src>
import jax
import jax.numpy as jnp
from jax.experimental import pallas as pl
from jax.experimental.pallas import tpu as pltpu

LANE = 128
SUBLANE = 8


def _round_up(v, m):
    return ((v + m - 1) // m) * m


def _cdiv(a, b):
    return -(-a // b)


def classification_head(x_nchw, weight, bias, *, tile_b=None, max_tile_hw=None,
                        weight_dtype=None, vmem_target_bytes=None, x_buffers=2):
    """x_nchw: [B, C, H, W]; weight: [K, C] (PyTorch Linear layout); bias: [K]."""
    B, C, H, W = map(int, x_nchw.shape)
    K = int(weight.shape[0])
    HW = H * W
    dtype = x_nchw.dtype
    dbytes = jnp.dtype(dtype).itemsize

    C_sub = _round_up(C, SUBLANE)            # sublane-padded C (VMEM layout)
    Kp = _round_up(max(K, 1), LANE)          # lane-dense output / MXU N dim

    # ---- batch tile ------------------------------------------------------
    if tile_b is None:
        tile_b = 128 if B >= 256 else (64 if B >= 128 else 8)
    tB = B if B <= tile_b else _round_up(tile_b, SUBLANE)
    nB = _cdiv(B, tB)

    # ---- resident weight dtype (halve VMEM residency for big heads) -------
    if weight_dtype is None:
        weight_dtype = jnp.bfloat16 if C_sub * Kp * 4 > (4 << 20) else jnp.float32
    w_itemsize = jnp.dtype(weight_dtype).itemsize

    # ---- VMEM budget (generation-aware, guarded) ---------------------------
    if vmem_target_bytes is None:
        phys = 64 << 20                      # assume the smallest (v7x) if unknown
        try:
            info = pltpu.get_tpu_info()
            phys = int(getattr(info, "vmem_capacity_bytes", phys)) or phys
        except Exception:
            pass
        vmem_target_bytes = max(40 << 20, min(phys * 3 // 4, 96 << 20))

    acc_lanes = HW if HW <= LANE else LANE
    w_bytes = 2 * C_sub * Kp * w_itemsize                    # conservative 2x
    b_bytes = SUBLANE * Kp * 4
    acc_bytes = tB * C_sub * LANE * 4
    out_bytes = 2 * _round_up(tB, SUBLANE) * Kp * 4
    fixed_bytes = w_bytes + b_bytes + acc_bytes + out_bytes + (2 << 20)

    # ---- HW tile: largest 128-multiple that fits the x double-buffer -------
    per_chunk = max(2, x_buffers) * tB * C_sub * LANE * dbytes
    if HW <= LANE:
        tHW = HW                              # single block == full spatial dim
    else:
        budget = max(vmem_target_bytes - fixed_bytes, per_chunk)
        max_chunks = max(1, budget // per_chunk)
        tHW = int(min(max_chunks, HW // LANE)) * LANE
        if max_tile_hw is not None:
            tHW = min(tHW, max(LANE, (int(max_tile_hw) // LANE) * LANE))
        tHW = max(LANE, tHW)
    nHW = _cdiv(HW, tHW)

    x_bytes = max(2, x_buffers) * tB * C_sub * _round_up(tHW, LANE) * dbytes
    vmem_limit = int(max(fixed_bytes + x_bytes + (4 << 20), 24 << 20))

    # ---- split the HW reduction across two parallel chains when the batch
    #      axis alone cannot feed both TensorCores (v7x megacore) -------------
    hw_split = 2 if (nB < 2 and nHW >= 2) else 1
    n_per = _cdiv(nHW, hw_split)
    total_blocks = hw_split * n_per
    needs_clamp = total_blocks > nHW          # overflow blocks re-read last block
    needs_mask = total_blocks * tHW > HW      # tail / overflow masking needed
    first_masked = HW // tHW                  # block indices >= this need a mask

    if tHW <= LANE:
        chunk_slices = ((0, tHW),)
    else:
        chunk_slices = tuple((j * LANE, LANE) for j in range(tHW // LANE))

    # ---- kernel ------------------------------------------------------------
    def kernel(x_ref, w_ref, b_ref, o_ref, acc_ref):
        s = pl.program_id(0)
        hw = pl.program_id(2)
        raw_idx = s * n_per + hw              # global hw-block index (may overflow)

        @pl.when(hw == 0)
        def _():
            acc_ref[...] = jnp.zeros_like(acc_ref)

        def accumulate(with_mask):
            # Deferred reduction: accumulate 128-lane slabs with plain VPU adds.
            partial = None
            for start, size in chunk_slices:
                chunk = x_ref[:, :, start:start + size]
                if with_mask:
                    pos = (raw_idx * tHW + start
                           + jax.lax.broadcasted_iota(jnp.int32, chunk.shape, 2))
                    chunk = jnp.where(pos < HW, chunk, 0)
                chunk = chunk.astype(jnp.float32)
                partial = chunk if partial is None else partial + chunk
            acc_ref[...] += partial

        if needs_mask:
            @pl.when(raw_idx < first_masked)
            def _():
                accumulate(False)

            @pl.when(raw_idx >= first_masked)
            def _():
                accumulate(True)
        else:
            accumulate(False)

        @pl.when(hw == n_per - 1)
        def _():
            # Single cross-lane reduce + relayout + MXU matmul, once per chain.
            pooled = jnp.sum(acc_ref[...], axis=-1)              # (tB, C) f32
            out = jnp.dot(pooled.astype(w_ref.dtype), w_ref[...],
                          preferred_element_type=jnp.float32)
            out = out + b_ref[...]
            o_ref[...] = out.astype(o_ref.dtype)

    # ---- index maps --------------------------------------------------------
    if needs_clamp:
        last_block = nHW - 1

        def x_index(s, b, hw):
            return (b, 0, jnp.minimum(s * n_per + hw, last_block))
    else:
        def x_index(s, b, hw):
            return (b, 0, s * n_per + hw)

    x_spec_kwargs = {}
    if x_buffers != 2:                         # deeper buffering only on request
        x_spec_kwargs["pipeline_mode"] = pl.Buffered(x_buffers)
    x_spec = pl.BlockSpec((tB, C, tHW), x_index, **x_spec_kwargs)

    # ---- wrapper-side glue (all tiny; no full-array copy of x) -------------
    x_flat = x_nchw.reshape(B, C, HW)          # free reshape, no pad
    w_t = weight.astype(jnp.float32).T * (1.0 / float(HW))      # cast first, then scale
    w_pad = jnp.pad(w_t, ((0, 0), (0, Kp - K))).astype(weight_dtype)
    # bias pre-scaled by 1/hw_split so summing the partial outputs restores it.
    b_pad = jnp.pad(bias.astype(jnp.float32) * (1.0 / hw_split),
                    (0, Kp - K)).reshape(1, Kp)

    partials = pl.pallas_call(
        kernel,
        out_shape=jax.ShapeDtypeStruct((hw_split, B, Kp), jnp.float32),
        grid_spec=pltpu.PrefetchScalarGridSpec(
            num_scalar_prefetch=0,
            grid=(hw_split, nB, n_per),
            in_specs=[
                x_spec,
                pl.BlockSpec((C, Kp), lambda s, b, hw: (0, 0)),   # VMEM-resident
                pl.BlockSpec((1, Kp), lambda s, b, hw: (0, 0)),   # VMEM-resident
            ],
            out_specs=pl.BlockSpec((None, tB, Kp), lambda s, b, hw: (s, b, 0)),
            scratch_shapes=[pltpu.VMEM((tB, C, acc_lanes), jnp.float32)],
        ),
        compiler_params=pltpu.CompilerParams(
            dimension_semantics=("parallel", "parallel", "arbitrary"),
            vmem_limit_bytes=vmem_limit,
        ),
    )(x_flat, w_pad, b_pad)

    out = partials.sum(axis=0)[:, :K].astype(dtype)
    if K == 1:                                 # matches `x = x[:, 0]` in the module
        out = out[:, 0]
    return out


if __name__ == "__main__":
    def reference(x, w, b):
        return jnp.mean(x, axis=(2, 3)) @ w.T + b

    key = jax.random.PRNGKey(0)

    # --- primary check: module-default-ish small shapes ---------------------
    B, C, H, W, K = 2, 4, 16, 16, 10
    k1, k2, key = jax.random.split(key, 3)
    x = jax.random.normal(k1, (B, C, H, W), dtype=jnp.float32)
    weight = 0.01 * jax.random.normal(k2, (K, C), dtype=jnp.float32)  # init_weights()
    bias = jnp.zeros((K,), dtype=jnp.float32)
    # max_tile_hw=128 forces a multi-block HW reduction (and the hw_split path)
    # at this toy size so the accumulate / finalize machinery runs on hardware.
    out = jax.block_until_ready(classification_head(x, weight, bias, max_tile_hw=128))
    ref = reference(x, weight, bias)
    assert out.shape == (B, K)
    assert jnp.allclose(out, ref, atol=1e-5, rtol=1e-5)

    # --- ragged shapes: HW tail masking + clamped overflow block + split ----
    B, C, H, W, K = 3, 16, 18, 15, 7          # HW=270 -> 3 blocks of 128
    k1, k2, k3, key = jax.random.split(key, 4)
    x = jax.random.normal(k1, (B, C, H, W), dtype=jnp.float32)
    weight = 0.05 * jax.random.normal(k2, (K, C), dtype=jnp.float32)
    bias = 0.1 * jax.random.normal(k3, (K,), dtype=jnp.float32)
    out = jax.block_until_ready(classification_head(x, weight, bias, max_tile_hw=128))
    ref = reference(x, weight, bias)
    assert out.shape == (B, K)
    assert jnp.allclose(out, ref, atol=1e-4, rtol=1e-4)

    # --- num_classes == 1 squeeze + HW < 128 single-block path --------------
    B, C, H, W, K = 2, 4, 5, 5, 1
    k1, k2, key = jax.random.split(key, 3)
    x = jax.random.normal(k1, (B, C, H, W), dtype=jnp.float32)
    weight = 0.01 * jax.random.normal(k2, (K, C), dtype=jnp.float32)
    bias = jnp.zeros((K,), dtype=jnp.float32)
    out = jax.block_until_ready(classification_head(x, weight, bias))
    ref = reference(x, weight, bias)[:, 0]
    assert out.shape == (B,)
    assert jnp.allclose(out, ref, atol=1e-5, rtol=1e-5)

    print("KERNEL_OK")
</pallas_src>

<mosaic_0001>
module attributes {stable_mosaic.version = 11 : i64} {
  func.func @kernel(%arg0: i32, %arg1: i32, %arg2: i32, %arg3: memref<2x4x128xf32, #tpu.memory_space<vmem>>, %arg4: memref<4x128xf32, #tpu.memory_space<vmem>>, %arg5: memref<1x128xf32, #tpu.memory_space<vmem>>, %arg6: memref<1x2x128xf32, #tpu.memory_space<vmem>>, %arg7: memref<2x4x128xf32, #tpu.memory_space<vmem>>) attributes {dimension_semantics = [#tpu.dimension_semantics<parallel>, #tpu.dimension_semantics<parallel>, #tpu.dimension_semantics<arbitrary>], iteration_bounds = array<i64: 2, 1, 1>, scalar_prefetch = 0 : i64, scratch_operands = 1 : i64, tpu.core_type = #tpu.core_type<tc>, window_params = [{transform_indices = @transform_0, window_bounds = array<i64: 2, 4, 128>}, {pipeline_mode = #tpu.pipeline_mode<synchronous>, transform_indices = @transform_1, window_bounds = array<i64: 4, 128>}, {pipeline_mode = #tpu.pipeline_mode<synchronous>, transform_indices = @transform_2, window_bounds = array<i64: 1, 128>}, {transform_indices = @transform_3, window_bounds = array<i64: 1, 2, 128>}]} {
    %c0_i32 = arith.constant 0 : i32
    %0 = arith.cmpi eq, %arg2, %c0_i32 : i32
    %1 = arith.extui %0 : i1 to i32
    %c0_i32_0 = arith.constant 0 : i32
    %2 = arith.cmpi ne, %1, %c0_i32_0 : i32
    scf.if %2 {
      %cst = arith.constant 0.000000e+00 : f32
      %10 = vector.broadcast %cst : f32 to vector<2x4x128xf32>
      %c0_11 = arith.constant 0 : index
      %c0_12 = arith.constant 0 : index
      %c0_13 = arith.constant 0 : index
      %11 = vector.load %arg7[%c0_11, %c0_12, %c0_13] : memref<2x4x128xf32, #tpu.memory_space<vmem>>, vector<2x4x128xf32>
      tpu.vector_store %arg7[%c0_11, %c0_12, %c0_13], %10 {strides = array<i32>} : memref<2x4x128xf32, #tpu.memory_space<vmem>>, vector<2x4x128xf32>,
    } else {
    }
    %c0 = arith.constant 0 : index
    %c0_1 = arith.constant 0 : index
    %c0_2 = arith.constant 0 : index
    %3 = vector.load %arg3[%c0, %c0_1, %c0_2] : memref<2x4x128xf32, #tpu.memory_space<vmem>>, vector<2x4x128xf32>
    %c0_3 = arith.constant 0 : index
    %c0_4 = arith.constant 0 : index
    %c0_5 = arith.constant 0 : index
    %4 = vector.load %arg7[%c0_3, %c0_4, %c0_5] : memref<2x4x128xf32, #tpu.memory_space<vmem>>, vector<2x4x128xf32>
    %5 = arith.addf %4, %3 : vector<2x4x128xf32>
    %c0_6 = arith.constant 0 : index
    %c0_7 = arith.constant 0 : index
    %c0_8 = arith.constant 0 : index
    %6 = vector.load %arg7[%c0_6, %c0_7, %c0_8] : memref<2x4x128xf32, #tpu.memory_space<vmem>>, vector<2x4x128xf32>
    tpu.vector_store %arg7[%c0_6, %c0_7, %c0_8], %5 {strides = array<i32>} : memref<2x4x128xf32, #tpu.memory_space<vmem>>, vector<2x4x128xf32>,
    %c0_i32_9 = arith.constant 0 : i32
    %7 = arith.cmpi eq, %arg2, %c0_i32_9 : i32
    %8 = arith.extui %7 : i1 to i32
    %c0_i32_10 = arith.constant 0 : i32
    %9 = arith.cmpi ne, %8, %c0_i32_10 : i32
    scf.if %9 {
      %c0_11 = arith.constant 0 : index
      %c0_12 = arith.constant 0 : index
      %c0_13 = arith.constant 0 : index
      %10 = vector.load %arg7[%c0_11, %c0_12, %c0_13] : memref<2x4x128xf32, #tpu.memory_space<vmem>>, vector<2x4x128xf32>
      %cst = arith.constant dense<0.000000e+00> : vector<2x4xf32>
      %11 = vector.multi_reduction <add>, %10, %cst [2] : vector<2x4x128xf32> to vector<2x4xf32>
      %c0_14 = arith.constant 0 : index
      %c0_15 = arith.constant 0 : index
      %12 = vector.load %arg4[%c0_14, %c0_15] : memref<4x128xf32, #tpu.memory_space<vmem>>, vector<4x128xf32>
      %cst_16 = arith.constant dense<0.000000e+00> : vector<2x128xf32>
      %13 = tpu.matmul %11, %12, %cst_16 {dimension_numbers = #tpu.dot_dimension_numbers<[1], [0], [0], [1], [0, 0, 1, 1], [], []>} : vector<2x4xf32>, vector<4x128xf32>, vector<2x128xf32> -> vector<2x128xf32>
      %c0_17 = arith.constant 0 : index
      %c0_18 = arith.constant 0 : index
      %14 = vector.load %arg5[%c0_17, %c0_18] : memref<1x128xf32, #tpu.memory_space<vmem>>, vector<1x128xf32>
      %15 = vector.broadcast %14 : vector<1x128xf32> to vector<2x128xf32>
      %16 = arith.addf %13, %15 : vector<2x128xf32>
      %c0_19 = arith.constant 0 : index
      %c0_20 = arith.constant 0 : index
      %c0_21 = arith.constant 0 : index
      %17 = vector.load %arg6[%c0_19, %c0_20, %c0_21] : memref<1x2x128xf32, #tpu.memory_space<vmem>>, vector<1x2x128xf32>
      %18 = vector.shape_cast %17 : vector<1x2x128xf32> to vector<2x128xf32>
      %19 = vector.shape_cast %16 : vector<2x128xf32> to vector<1x2x128xf32>
      tpu.vector_store %arg6[%c0_19, %c0_20, %c0_21], %19 {strides = array<i32>} : memref<1x2x128xf32, #tpu.memory_space<vmem>>, vector<1x2x128xf32>,
    } else {
    }
    return
  }
  func.func @transform_0(%arg0: i32, %arg1: i32, %arg2: i32) -> (i32, i32, i32) {
    %c1_i32 = arith.constant 1 : i32
    %0 = arith.muli %arg0, %c1_i32 : i32
    %1 = arith.addi %0, %arg2 : i32
    %c0_i32 = arith.constant 0 : i32
    %c0_i32_0 = arith.constant 0 : i32
    return %arg1, %c0_i32, %1 : i32, i32, i32
  }
  func.func @transform_1(%arg0: i32, %arg1: i32, %arg2: i32) -> (i32, i32) {
    %c0_i32 = arith.constant 0 : i32
    %c0_i32_0 = arith.constant 0 : i32
    %c0_i32_1 = arith.constant 0 : i32
    return %c0_i32, %c0_i32_0 : i32, i32
  }
  func.func @transform_2(%arg0: i32, %arg1: i32, %arg2: i32) -> (i32, i32) {
    %c0_i32 = arith.constant 0 : i32
    %c0_i32_0 = arith.constant 0 : i32
    %c0_i32_1 = arith.constant 0 : i32
    return %c0_i32, %c0_i32_0 : i32, i32
  }
  func.func @transform_3(%arg0: i32, %arg1: i32, %arg2: i32) -> (i32, i32, i32) {
    %c0_i32 = arith.constant 0 : i32
    %c0_i32_0 = arith.constant 0 : i32
    return %arg0, %arg1, %c0_i32 : i32, i32, i32
  }
}

</mosaic_0001>

<llo_original>
// kernel: tpu_custom_call.1
$region0: #{tpu_custom_call.1}
  #allocation0 [shape = 'u32[]', space=smem, size = 0x4, offset = 0x4, fixed_abs, tag = 'smem constant byte address 0x4 - core index']
  #allocation1 [shape = 'u32[144,128]{1,0:T(1,128)}', space=vmem, size = 0x12000, scoped, tag = 'internal scratch']
  #allocation2 [shape = 'f32[2,4,128]{2,1,0:T(4,128)}', space=vmem, size = 0x1000, scoped, tag = 'scratch operand']
  %s0 = inlined_call_operand.hbm [shape: f32[2,4,256], index: 0, kind: input, shape index: {}]
  %s1 = inlined_call_operand.hbm [shape: f32[4,128], index: 1, kind: input, shape index: {}]
  %s2 = inlined_call_operand.vmem [shape: f32[1,128], index: 2, kind: input, shape index: {}]
  %s3 = inlined_call_operand.hbm [shape: f32[2,2,128], index: 3, kind: output, shape index: {}]
  %s4 = sld [smem:[#allocation0]]
  $region61: #{tpu_custom_call.1} parent=0
    _
  %s6 = ssub.s32 1, %s4
  %s7 = scalar_select 0, %s6, %s4
  $region1: #{tpu_custom_call.1} parent=0
    #allocation3 [shape = 'u8[8192]{0}', space=vmem, size = 0x2000, scoped, tag = 'input window, operand 0']
    #allocation4 [shape = 's32[2]{0}', space=sflag, size = 0x8, scoped, tag = 'scoped memory for tpu_custom_call.1']
    #allocation5 [shape = 's32[2]{0}', space=sflag, size = 0x8, scoped, tag = 'scoped memory for tpu_custom_call.1']
    #allocation6 [shape = 'u8[2048]{0}', space=vmem, size = 0x800, scoped, tag = 'input window, operand 1, single buffered']
    #allocation7 [shape = 's32[1]{0}', space=sflag, size = 0x4, scoped, tag = 'scoped memory for tpu_custom_call.1']
    #allocation8 [shape = 'u8[2048]{0}', space=vmem, size = 0x800, scoped, tag = 'output window, operand 0']
    %8 = vsyncpa [#allocation4], 0
    %s9 = scalar_lea.sflag [#allocation4], 1
    %10 = vsyncpa %s9, 0
    %11 = vsyncpa [#allocation7], 0
    %12 = vsyncpa [#allocation5], 0
    %s13 = scalar_lea.sflag [#allocation5], 1
    %14 = vsyncpa %s13, 0
    loop: start=0, step=1, limit=4
    $region2: #{tpu_custom_call.1} parent=1 // loop_pre_header
      _
    $region3: #{tpu_custom_call.1} parent=1 // loop_header
      %s16 = sphi 0, %s20
      %p17 = scmp.ge.s32.totalorder %s16, 4
      %s23 = sphi 0, %s42
      %s24 = sphi 0, %s38
      %s25 = sphi 0, %s34
      %s26 = sphi 0, %s23
      %s27 = sphi 0, %s24
      %s28 = sphi 0, %s25
      %s29 = sphi 0, %s26
      %s30 = sphi 0, %s27
      %s31 = sphi 0, %s28
      %s49 = sphi 0, %s51
      %s52 = sphi 0, %s49
      %s53 = sphi 0, %s52
      %s69 = sphi 0, %s53
      %s73 = sphi 0, %s73
      %s75 = sphi 0, %s73
      %s76 = sphi 0, %s75
      %s90 = sphi 0, %s76
      %s94 = sphi 0, %s94
      %s96 = sphi 0, %s94
      %s97 = sphi 0, %s96
      %s111 = sphi 0, %s97
      %s119 = sphi 0, %s121
      %s122 = sphi 0, %s119
      %s123 = sphi 0, %s122
      %s139 = sphi 0, %s123
    $region4: #{tpu_custom_call.1} parent=1 // loop_header_branch
      %19 = sbr.rel (%p17) target = $region8
    $region5: #{tpu_custom_call.1} parent=1 // loop_body
      %s21 = ssub.s32 %s16, 1
      %s22 = ssub.s32 %s16, 2
      %s32 = sadd.s32 1, %s25
      %p33 = scmp.ge.s32.totalorder %s32, 1
      %s34 = scalar_select %p33, 0, %s32
      %s35 = sadd.s32 1, %s24
      %s36 = scalar_select %p33, %s35, %s24
      %p37 = scmp.ge.s32.totalorder %s36, 1
      %s38 = scalar_select %p37, 0, %s36
      %s39 = sadd.s32 1, %s23
      %s40 = scalar_select %p37, %s39, %s23
      %p41 = scmp.ge.s32.totalorder %s40, 2
      %s42 = scalar_select %p41, 0, %s40
      %s43 = sadd.s32 %s23, %s25
      %s44 = sadd.s32 %s42, %s34
      %s45 = ssub.s32 %s24, %s38
      %s46 = ssub.s32 %s43, %s44
      %s47 = sor.u32 %s45, %s46
      %p48 = scmp.eq.s32.totalorder %s47, 0
      %s50 = sadd.s32 %s49, 1
      %s51 = scalar_select %p48, %s49, %s50
      %p54 = pneg %p48
      %p55 = scmp.eq.s32.totalorder %s16, 1
      %p56 = por %p54, %p55
      %p57 = scmp.ne.s32.totalorder %s49, %s52
      %p58 = scmp.eq.s32.totalorder %s16, 0
      %p59 = por %p57, %p58
      %p60 = scmp.ne.s32.totalorder %s49, %s52
      %p61 = scmp.eq.s32.totalorder %s21, 1
      %p62 = por %p60, %p61
      %p63 = scmp.ne.s32.totalorder %s52, %s53
      %p64 = scmp.eq.s32.totalorder %s21, 0
      %p65 = por %p63, %p64
      %p66 = scmp.ne.s32.totalorder %s52, %s53
      %p67 = scmp.eq.s32.totalorder %s22, 1
      %p68 = por %p66, %p67
      %p70 = scmp.ne.s32.totalorder %s53, %s69
      %p71 = scmp.eq.s32.totalorder %s22, 0
      %p72 = por %p70, %p71
      %s74 = sadd.s32 %s73, 1
      %p77 = scmp.eq.s32.totalorder %s16, 1
      %p78 = scmp.ne.s32.totalorder %s73, %s75
      %p79 = scmp.eq.s32.totalorder %s16, 0
      %p80 = por %p78, %p79
      %p81 = scmp.ne.s32.totalorder %s73, %s75
      %p82 = scmp.eq.s32.totalorder %s21, 1
      %p83 = por %p81, %p82
      %p84 = scmp.ne.s32.totalorder %s75, %s76
      %p85 = scmp.eq.s32.totalorder %s21, 0
      %p86 = por %p84, %p85
      %p87 = scmp.ne.s32.totalorder %s75, %s76
      %p88 = scmp.eq.s32.totalorder %s22, 1
      %p89 = por %p87, %p88
      %p91 = scmp.ne.s32.totalorder %s76, %s90
      %p92 = scmp.eq.s32.totalorder %s22, 0
      %p93 = por %p91, %p92
      %s95 = sadd.s32 %s94, 1
      %p98 = scmp.eq.s32.totalorder %s16, 1
      %p99 = scmp.ne.s32.totalorder %s94, %s96
      %p100 = scmp.eq.s32.totalorder %s16, 0
      %p101 = por %p99, %p100
      %p102 = scmp.ne.s32.totalorder %s94, %s96
      %p103 = scmp.eq.s32.totalorder %s21, 1
      %p104 = por %p102, %p103
      %p105 = scmp.ne.s32.totalorder %s96, %s97
      %p106 = scmp.eq.s32.totalorder %s21, 0
      %p107 = por %p105, %p106
      %p108 = scmp.ne.s32.totalorder %s96, %s97
      %p109 = scmp.eq.s32.totalorder %s22, 1
      %p110 = por %p108, %p109
      %p112 = scmp.ne.s32.totalorder %s97, %s111
      %p113 = scmp.eq.s32.totalorder %s22, 0
      %p114 = por %p112, %p113
      %s115 = ssub.s32 %s23, %s42
      %s116 = ssub.s32 %s24, %s38
      %s117 = sor.u32 %s115, %s116
      %p118 = scmp.eq.s32.totalorder %s117, 0
      %s120 = sadd.s32 %s119, 1
      %s121 = scalar_select %p118, %s119, %s120
      %p124 = pneg %p118
      %p125 = scmp.eq.s32.totalorder %s16, 1
      %p126 = por %p124, %p125
      %p127 = scmp.ne.s32.totalorder %s119, %s122
      %p128 = scmp.eq.s32.totalorder %s16, 0
      %p129 = por %p127, %p128
      %p130 = scmp.ne.s32.totalorder %s119, %s122
      %p131 = scmp.eq.s32.totalorder %s21, 1
      %p132 = por %p130, %p131
      %p133 = scmp.ne.s32.totalorder %s122, %s123
      %p134 = scmp.eq.s32.totalorder %s21, 0
      %p135 = por %p133, %p134
      %p136 = scmp.ne.s32.totalorder %s122, %s123
      %p137 = scmp.eq.s32.totalorder %s22, 1
      %p138 = por %p136, %p137
      %p140 = scmp.ne.s32.totalorder %s123, %s139
      %p141 = scmp.eq.s32.totalorder %s22, 0
      %p142 = por %p140, %p141
      %p143 = scmp.le.s32.totalorder 1, %s16
      %p144 = scmp.lt.s32.totalorder %s16, 3
      %p145 = pnand %p143, %p144
      %p146 = pneg %p145
      // Predicated region
      $region9: #{tpu_custom_call.1} parent=5 // pred_check
        _
      $region10: #{tpu_custom_call.1} parent=5 // pred_check_branch
        %148 = sbr.rel (%p145) target = $region12
      $region11: #{tpu_custom_call.1} parent=5 // pred_region
        %s149 = ssub.s32 %s16, 1
        // Predicated region
        $region13: #{tpu_custom_call.1} parent=11 // pred_check
          %p150 = pneg %p86
        $region14: #{tpu_custom_call.1} parent=11 // pred_check_branch
          %152 = sbr.rel (%p150) target = $region16
        $region15: #{tpu_custom_call.1} parent=11 // pred_region
          %s154 = ssub.s32 64, 64
          %155 = vsyncadd [#allocation7], %s154
          %s157 = sshll.u32 [#allocation6], 4
          %s158 = int_to_ptr.vmem [resolvable:$true] %s157
          %160 = dma.hbm_to_vmem [thread:$0]  %s1, 64, %s158, [#allocation7]
        $region16: #{tpu_custom_call.1} parent=11 // pred_fallthru
          _
        // Predicated region
        $region17: #{tpu_custom_call.1} parent=11 // pred_check
          %p161 = pneg %p107
        $region18: #{tpu_custom_call.1} parent=11 // pred_check_branch
          %163 = sbr.rel (%p161) target = $region20
        $region19: #{tpu_custom_call.1} parent=11 // pred_region
          _
        $region20: #{tpu_custom_call.1} parent=11 // pred_fallthru
          _
      $region12: #{tpu_custom_call.1} parent=5 // pred_fallthru
        _
      %p164 = scmp.lt.s32.totalorder %s16, 2
      // Predicated region
      $region21: #{tpu_custom_call.1} parent=5 // pred_check
        %p165 = pneg %p164
      $region22: #{tpu_custom_call.1} parent=5 // pred_check_branch
        %167 = sbr.rel (%p165) target = $region24
      $region23: #{tpu_custom_call.1} parent=5 // pred_region
        // Predicated region
        $region25: #{tpu_custom_call.1} parent=23 // pred_check
          %p168 = pneg %p59
        $region26: #{tpu_custom_call.1} parent=23 // pred_check_branch
          %170 = sbr.rel (%p168) target = $region28
        $region27: #{tpu_custom_call.1} parent=23 // pred_region
          %s171 = sand.u32 %s49, 1
          %s172 = scalar_lea.sflag [#allocation4], %s171
          %s173 = sand.u32 %s49, 1
          %s174 = smul.addr %s173, 8
          %s175 = scalar_lea.vmem [#allocation3], %s174
          %s176 = sadd.s32 %s23, %s25
          %s177 = smul.u32 2, %s24
          %s179 = ssub.s32 128, 128
          %180 = vsyncadd %s172, %s179
          %s181 = smul.addr %s177, 2
          %s182 = sadd.s32 %s176, %s181
          %s183 = smul.addr %s182, 64
          %s184 = scalar_lea.hbm %s0, %s183
          %s185 = sshll.u32 %s175, 4
          %s186 = int_to_ptr.vmem [resolvable:$true] %s185
          %191 = dma.hbm_to_vmem [thread:$0]  %s184, 128, %s186, %s172, 128, 64, 4
        $region28: #{tpu_custom_call.1} parent=23 // pred_fallthru
          _
      $region24: #{tpu_custom_call.1} parent=5 // pred_fallthru
        _
      %p192 = scmp.le.s32.totalorder 1, %s16
      %p193 = scmp.lt.s32.totalorder %s16, 3
      %p194 = pnand %p192, %p193
      %p195 = pneg %p194
      // Predicated region
      $region29: #{tpu_custom_call.1} parent=5 // pred_check
        _
      $region30: #{tpu_custom_call.1} parent=5 // pred_check_branch
        %197 = sbr.rel (%p194) target = $region32
      $region31: #{tpu_custom_call.1} parent=5 // pred_region
        %s198 = ssub.s32 %s16, 1
        %s199 = sand.u32 %s52, 1
        %s200 = scalar_lea.sflag [#allocation4], %s199
        %s201 = sand.u32 %s52, 1
        %s202 = smul.addr %s201, 8
        %s203 = scalar_lea.vmem [#allocation3], %s202
        // Predicated region
        $region33: #{tpu_custom_call.1} parent=31 // pred_check
          %p204 = pneg %p65
        $region34: #{tpu_custom_call.1} parent=31 // pred_check_branch
          %206 = sbr.rel (%p204) target = $region36
        $region35: #{tpu_custom_call.1} parent=31 // pred_region
          %207 = dma.done %s200, 128
        $region36: #{tpu_custom_call.1} parent=31 // pred_fallthru
          _
        // Predicated region
        $region37: #{tpu_custom_call.1} parent=31 // pred_check
          %p208 = pneg %p86
        $region38: #{tpu_custom_call.1} parent=31 // pred_check_branch
          %210 = sbr.rel (%p208) target = $region40
        $region39: #{tpu_custom_call.1} parent=31 // pred_region
          %211 = dma.done [#allocation7], 64
        $region40: #{tpu_custom_call.1} parent=31 // pred_fallthru
          _
        %s212 = sand.u32 %s52, 1
        %s213 = scalar_lea.sflag [#allocation4], %s212
        %s214 = sand.u32 %s52, 1
        %s215 = smul.addr %s214, 8
        %s216 = scalar_lea.vmem [#allocation3], %s215
        %p217 = pneg %p65
        %p218 = pneg %p62
        %p219 = pneg %p86
        %p220 = pneg %p83
        %p221 = pneg %p107
        %p222 = pneg %p104
        %p223 = pneg %p135
        %p224 = pneg %p132
        %s225 = sand.u32 %s122, 1
        %s226 = scalar_lea.sflag [#allocation5], %s225
        %s227 = sand.u32 %s122, 1
        %s228 = smul.addr %s227, 2
        %s229 = scalar_lea.vmem [#allocation8], %s228
        %s230 = sadd.s32 %s26, %s28
        %s231 = smul.u32 2, %s27
        %p232 = scmp.eq.s32.totalorder %s28, 0
        // Predicated region
        $region41: #{tpu_custom_call.1} parent=31 // pred_check
          %p233 = pneg %p232
        $region42: #{tpu_custom_call.1} parent=31 // pred_check_branch
          %235 = sbr.rel (%p233) target = $region44
        $region43: #{tpu_custom_call.1} parent=31 // pred_region
          %236 = vst [vmem:[#allocation2] sm:$0xf] 0.0
          %237 = vst [vmem:[#allocation2 + $0x4] sm:$0xf] 0.0
        $region44: #{tpu_custom_call.1} parent=31 // pred_fallthru
          _
        %v238 = vld [vmem:[%s203] sm:$0xf]
        %v239 = vld [vmem:[%s203 + $0x4] sm:$0xf]
        %v240 = vld [vmem:[#allocation2] sm:$0xf]
        %v241 = vld [vmem:[#allocation2 + $0x4] sm:$0xf]
        %v242 = vadd.f32 %v240, %v238
        %v243 = vadd.f32 %v241, %v239
        %244 = vst [vmem:[#allocation2] sm:$0xf] %v242
        %245 = vst [vmem:[#allocation2 + $0x4] sm:$0xf] %v243
        // Predicated region
        $region45: #{tpu_custom_call.1} parent=31 // pred_check
          %p246 = pneg %p232
        $region46: #{tpu_custom_call.1} parent=31 // pred_check_branch
          %248 = sbr.rel (%p246) target = $region48
        $region47: #{tpu_custom_call.1} parent=31 // pred_region
          %v249 = vld [vmem:[#allocation2] sm:$0xf]
          %v250 = vld [vmem:[#allocation2 + $0x4] sm:$0xf]
          %vm251 = vcmask 1043456
          %v252 = vsel %vm251, %v249, 0.0
          %253 = vadd.xlane.f32.xlu0 %v252
          %v254 = vpop.xlane.xlu0 %253
          %v255 = vsel %vm251, %v250, 0.0
          %256 = vadd.xlane.f32.xlu0 %v255
          %v257 = vpop.xlane.xlu0 %256
          %v258 = vld [vmem:[#allocation6] sm:$0xf]
          %v259 = vld [vmem:[%s2] sm:$0x1]
          %v261 = vlaneseq
          %v262 = vshrl.u32 %v261, 7
          %v263 = vsub.s32 0, %v262
          %v264 = vrot.slane %v259, %v263
          %v268 = vlaneseq
          %v269 = vand.u32 %v268, 127
          %v270 = vlaneseq
          %v271 = vshrl.u32 %v270, 7
          %v272 = vsub.s32 %v269, %v271
          %v273 = vrot.slane %v254, %v272
          %v274 = vlaneseq
          %v275 = vshrl.u32 %v274, 7
          %v276 = vsub.s32 %v269, %v275
          %v277 = vrot.slane %v257, %v276
          %vm278 = vcmask 1041409
          %v279 = vsel %vm278, %v277, %v273
          %vm280 = vcmask 31744
          %v281 = vsel %vm280, %v279, 0
          %v284 = vsel %vm251, %v258, 0
          %286 = vmatprep.subr.mxu0 0.0
          %287 = vmatpush1.msra.mxu0 %v284
          %288 = vmatprep.subr.mxu0 0.0
          %289 = vmatpush1.msra.mxu0 0.0
          %290 = vmatprep.subr.mxu0 0.0
          %291 = vmatpush1.msra.mxu0 0.0
          %292 = vmatprep.subr.mxu0 0.0
          %293 = vmatpush1.msra.mxu0 0.0
          %294 = vmatprep.subr.mxu0 0.0
          %295 = vmatpush1.msra.mxu0 0.0
          %296 = vmatprep.subr.mxu0 0.0
          %297 = vmatpush1.msra.mxu0 0.0
          %298 = vmatprep.subr.mxu0 0.0
          %299 = vmatpush1.msra.mxu0 0.0
          %300 = vmatprep.subr.mxu0 0.0
          %301 = vmatpush1.msra.mxu0 0.0
          %302 = vmatprep.subr.mxu0 0.0
          %303 = vmatpush1.msra.mxu0 0.0
          %304 = vmatprep.subr.mxu0 0.0
          %305 = vmatpush1.msra.mxu0 0.0
          %306 = vmatprep.subr.mxu0 0.0
          %307 = vmatpush1.msra.mxu0 0.0
          %308 = vmatprep.subr.mxu0 0.0
          %309 = vmatpush1.msra.mxu0 0.0
          %310 = vmatprep.subr.mxu0 0.0
          %311 = vmatpush1.msra.mxu0 0.0
          %312 = vmatprep.subr.mxu0 0.0
          %313 = vmatpush1.msra.mxu0 0.0
          %314 = vmatprep.subr.mxu0 0.0
          %315 = vmatpush1.msra.mxu0 0.0
          %316 = vmatprep.subr.mxu0 0.0
          %317 = vmatpush1.msra.mxu0 0.0
          %318 = vmatprep.subr.mxu0 0.0
          %319 = vmatpush1.msra.mxu0 0.0
          %320 = vmatprep.subr.mxu0 0.0
          %321 = vmatpush1.msra.mxu0 0.0
          %322 = vmatprep.subr.mxu0 0.0
          %323 = vmatpush1.msra.mxu0 0.0
          %324 = vmatprep.subr.mxu0 0.0
          %325 = vmatpush1.msra.mxu0 0.0
          %326 = vmatprep.subr.mxu0 0.0
          %327 = vmatpush1.msra.mxu0 0.0
          %328 = vmatprep.subr.mxu0 0.0
          %329 = vmatpush1.msra.mxu0 0.0
          %330 = vmatprep.subr.mxu0 0.0
          %331 = vmatpush1.msra.mxu0 0.0
          %332 = vmatprep.subr.mxu0 0.0
          %333 = vmatpush1.msra.mxu0 0.0
          %334 = vmatprep.subr.mxu0 0.0
          %335 = vmatpush1.msra.mxu0 0.0
          %336 = vmatprep.subr.mxu0 0.0
          %337 = vmatpush1.msra.mxu0 0.0
          %338 = vmatprep.subr.mxu0 0.0
          %339 = vmatpush1.msra.mxu0 0.0
          %340 = vmatprep.subr.mxu0 0.0
          %341 = vmatpush1.msra.mxu0 0.0
          %342 = vmatprep.subr.mxu0 0.0
          %343 = vmatpush1.msra.mxu0 0.0
          %344 = vmatprep.subr.mxu0 0.0
          %345 = vmatpush1.msra.mxu0 0.0
          %346 = vmatprep.subr.mxu0 0.0
          %347 = vmatpush1.msra.mxu0 0.0
          %348 = vmatprep.subr.mxu0 0.0
          %349 = vmatpush1.msra.mxu0 0.0
          %350 = vmatprep.mubr.f32.mxu0 0.0
          %351 = vmatmul.mubr.f32.gmra.mrb[0].mxu0 %v281
          %v352 = vpop.f32.mrb[0].mxu0
          %v353 = vadd.f32 %v264, %v352
          %v354 = vpop.f32.mrb[0].mxu0
          %355 = vdwg.mxu0
          %356 = vst [vmem:[%s229] sm:$0x3] %v353
        $region48: #{tpu_custom_call.1} parent=31 // pred_fallthru
          _
        %s357 = sand.u32 %s122, 1
        %s358 = scalar_lea.sflag [#allocation5], %s357
        %s359 = sand.u32 %s122, 1
        %s360 = smul.addr %s359, 2
        %s361 = scalar_lea.vmem [#allocation8], %s360
        // Predicated region
        $region49: #{tpu_custom_call.1} parent=31 // pred_check
          %p362 = pneg %p132
        $region50: #{tpu_custom_call.1} parent=31 // pred_check_branch
          %364 = sbr.rel (%p362) target = $region52
        $region51: #{tpu_custom_call.1} parent=31 // pred_region
          %s366 = ssub.s32 32, 32
          %367 = vsyncadd %s358, %s366
          %s368 = sadd.s32 %s27, %s26
          %s369 = smul.addr %s368, 32
          %s370 = scalar_lea.hbm %s3, %s369
          %s372 = sshll.u32 %s361, 4
          %s373 = int_to_ptr.vmem [resolvable:$true] %s372
          %375 = dma.vmem_to_hbm [thread:$0]  %s373, 32, %s370, %s358
        $region52: #{tpu_custom_call.1} parent=31 // pred_fallthru
          _
      $region32: #{tpu_custom_call.1} parent=5 // pred_fallthru
        _
      %p376 = scmp.le.s32.totalorder 2, %s16
      // Predicated region
      $region53: #{tpu_custom_call.1} parent=5 // pred_check
        %p377 = pneg %p376
      $region54: #{tpu_custom_call.1} parent=5 // pred_check_branch
        %379 = sbr.rel (%p377) target = $region56
      $region55: #{tpu_custom_call.1} parent=5 // pred_region
        %s380 = ssub.s32 %s16, 2
        // Predicated region
        $region57: #{tpu_custom_call.1} parent=55 // pred_check
          %p381 = pneg %p138
        $region58: #{tpu_custom_call.1} parent=55 // pred_check_branch
          %383 = sbr.rel (%p381) target = $region60
        $region59: #{tpu_custom_call.1} parent=55 // pred_region
          %s384 = sand.u32 %s123, 1
          %s385 = scalar_lea.sflag [#allocation5], %s384
          %s386 = sand.u32 %s123, 1
          %s387 = smul.addr %s386, 2
          %s388 = scalar_lea.vmem [#allocation8], %s387
          %389 = dma.done %s385, 32
        $region60: #{tpu_custom_call.1} parent=55 // pred_fallthru
          _
      $region56: #{tpu_custom_call.1} parent=5 // pred_fallthru
        _
    $region6: #{tpu_custom_call.1} parent=1 // loop_footer
      %s20 = sadd.s32 1, %s16
    $region7: #{tpu_custom_call.1} parent=1 // loop_footer_branch
      %15 = sbr.rel target = $region3
    $region8: #{tpu_custom_call.1} parent=1 // loop_exit
      _
    %390 = vsyncpa [#allocation4], 1
    %s391 = scalar_lea.sflag [#allocation4], 1
    %392 = vsyncpa %s391, 1
    %393 = vsyncpa [#allocation7], 1
    %394 = vsyncpa [#allocation5], 1
    %s395 = scalar_lea.sflag [#allocation5], 1
    %396 = vsyncpa %s395, 1

</llo_original>
